<compile_context>
chip_gen: v7x
topology: tpu7x:2x2x1
jax: 0.10.0
libtpu: 0.0.40
codegen_flags: <defaults>
</compile_context>

<pallas_src>
import functools

import jax
import jax.numpy as jnp
from jax.experimental import pallas as pl
from jax.experimental.pallas import tpu as pltpu


def _round_up(x: int, m: int) -> int:
    return (x + m - 1) // m * m


def _sublane(dtype) -> int:
    # second-minor alignment: 8 for 4-byte, 16 for 2-byte, 32 for 1-byte dtypes
    return max(8, 32 // jnp.dtype(dtype).itemsize)


def _make_kernel(precision):
    def kernel(x1_ref, x2_ref, o_ref, acc_ref):
        # x1_ref: (bt, tm, tk), x2_ref: (bt, tk, tn), o_ref: (bt, tm, tn)
        @pl.when(pl.program_id(3) == 0)
        def _init():
            acc_ref[...] = jnp.zeros_like(acc_ref)

        acc_ref[...] += jnp.einsum(
            "bmk,bkn->bmn",
            x1_ref[...],
            x2_ref[...],
            preferred_element_type=jnp.float32,
            precision=precision,
        )

        @pl.when(pl.program_id(3) == pl.num_programs(3) - 1)
        def _done():
            o_ref[...] = acc_ref[...].astype(o_ref.dtype)

    return kernel


def _bmm(x1: jax.Array, x2: jax.Array) -> jax.Array:
    """Batched matmul x1:(B,M,K) @ x2:(B,K,N) -> (B,M,N) via a tiled Pallas kernel."""
    B, M, K = x1.shape
    _, _, N = x2.shape
    out_dtype = jnp.result_type(x1.dtype, x2.dtype)

    # ---- pad to TPU-friendly sizes (zeros do not change the K reduction) ----
    sub_m = max(_sublane(x1.dtype), _sublane(out_dtype))
    M_pad = _round_up(M, sub_m)
    K_pad = _round_up(K, 128)   # lane dim of x1, sublane-aligned for x2 as well
    N_pad = _round_up(N, 128)   # lane dim of x2 and of the output -> lane-dense stores

    # ---- tile sizes (capped; full extent when the padded dim is small) ----
    tm = min(M_pad, 256)
    tn = min(N_pad, 256)
    tk = min(K_pad, 512)
    M_pad = _round_up(M_pad, tm)
    N_pad = _round_up(N_pad, tn)
    K_pad = _round_up(K_pad, tk)

    # ---- batch elements per grid step: amortize per-step overhead for tiny tiles ----
    in_itemsize = max(jnp.dtype(x1.dtype).itemsize, jnp.dtype(x2.dtype).itemsize)
    out_itemsize = jnp.dtype(out_dtype).itemsize
    per_elem_bytes = (tm * tk + tk * tn) * in_itemsize + tm * tn * (4 + out_itemsize)
    bt = max(1, min(B, (2 * 1024 * 1024) // per_elem_bytes, 16))
    B_pad = _round_up(B, bt)

    # ---- pad operands (only if needed) ----
    if (B_pad, M_pad, K_pad) != (B, M, K):
        x1 = jnp.pad(x1, ((0, B_pad - B), (0, M_pad - M), (0, K_pad - K)))
    if (B_pad, K_pad, N_pad) != (B, K, N):
        x2 = jnp.pad(x2, ((0, B_pad - B), (0, K_pad - K), (0, N_pad - N)))

    grid = (B_pad // bt, M_pad // tm, N_pad // tn, K_pad // tk)

    # f32 inputs: use full-precision MXU passes for torch.matmul parity.
    precision = (
        jax.lax.Precision.HIGHEST
        if jnp.result_type(x1.dtype, x2.dtype) == jnp.float32
        else None
    )

    # Rough VMEM working set (double-buffered inputs + double-buffered output + acc).
    vmem_est = (
        2 * bt * (tm * tk + tk * tn) * in_itemsize
        + 2 * bt * tm * tn * out_itemsize
        + bt * tm * tn * 4
    )
    vmem_limit = int(min(max(4 * vmem_est, 16 * 1024 * 1024), 32 * 1024 * 1024))

    cost = pl.CostEstimate(
        flops=2 * B_pad * M_pad * N_pad * K_pad,
        transcendentals=0,
        bytes_accessed=(
            B_pad * M_pad * K_pad * jnp.dtype(x1.dtype).itemsize * (N_pad // tn)
            + B_pad * K_pad * N_pad * jnp.dtype(x2.dtype).itemsize * (M_pad // tm)
            + B_pad * M_pad * N_pad * out_itemsize
        ),
    )

    out = pl.pallas_call(
        _make_kernel(precision),
        out_shape=jax.ShapeDtypeStruct((B_pad, M_pad, N_pad), out_dtype),
        grid_spec=pltpu.PrefetchScalarGridSpec(
            num_scalar_prefetch=0,
            grid=grid,
            in_specs=[
                pl.BlockSpec((bt, tm, tk), lambda b, i, j, k: (b, i, k)),
                pl.BlockSpec((bt, tk, tn), lambda b, i, j, k: (b, k, j)),
            ],
            out_specs=pl.BlockSpec((bt, tm, tn), lambda b, i, j, k: (b, i, j)),
            scratch_shapes=[pltpu.VMEM((bt, tm, tn), jnp.float32)],
        ),
        compiler_params=pltpu.CompilerParams(
            dimension_semantics=("parallel", "parallel", "parallel", "arbitrary"),
            vmem_limit_bytes=vmem_limit,
        ),
        cost_estimate=cost,
    )(x1, x2)

    return out[:B, :M, :N]


def pallas_matmul(x1: jax.Array, x2: jax.Array) -> jax.Array:
    """torch-style `x1 @ x2` for operands with ndim >= 2 (batch dims broadcast)."""
    assert x1.ndim >= 2 and x2.ndim >= 2, "expected operands with ndim >= 2"
    M, K = x1.shape[-2:]
    K2, N = x2.shape[-2:]
    assert K == K2, f"shape mismatch: {x1.shape} @ {x2.shape}"

    batch = jnp.broadcast_shapes(x1.shape[:-2], x2.shape[:-2])
    x1b = jnp.broadcast_to(x1, batch + (M, K)).reshape((-1, M, K))
    x2b = jnp.broadcast_to(x2, batch + (K, N)).reshape((-1, K, N))
    out = _bmm(x1b, x2b)
    return out.reshape(batch + (M, N))


if __name__ == "__main__":
    key = jax.random.PRNGKey(0)
    k1, k2, k3, k4 = jax.random.split(key, 4)

    # (batch, seq, hidden) @ (batch, hidden, seq') — matches the module's forward.
    B, M, K, N = 2, 8, 32, 16
    x1 = jax.random.normal(k1, (B, M, K), dtype=jnp.float32)
    x2 = jax.random.normal(k2, (B, K, N), dtype=jnp.float32)

    out = jax.block_until_ready(pallas_matmul(x1, x2))
    ref = jnp.matmul(x1, x2, precision=jax.lax.Precision.HIGHEST)
    assert out.shape == (B, M, N)
    assert jnp.allclose(out, ref, atol=1e-5, rtol=1e-5), "3-D mismatch vs reference"

    # 4-D attention-style usage (q @ k^T in TransGAN): (B, H, S, D) @ (B, H, D, S).
    q = jax.random.normal(k3, (2, 4, 8, 32), dtype=jnp.float32)
    kt = jax.random.normal(k4, (2, 4, 32, 8), dtype=jnp.float32)
    out4 = jax.block_until_ready(pallas_matmul(q, kt))
    ref4 = jnp.matmul(q, kt, precision=jax.lax.Precision.HIGHEST)
    assert jnp.allclose(out4, ref4, atol=1e-5, rtol=1e-5), "4-D mismatch vs reference"

    print("KERNEL_OK")
</pallas_src>

<mosaic_0001>
module attributes {stable_mosaic.version = 11 : i64} {
  func.func @kernel(%arg0: i32, %arg1: i32, %arg2: i32, %arg3: i32, %arg4: memref<2x8x128xf32, #tpu.memory_space<vmem>>, %arg5: memref<2x128x128xf32, #tpu.memory_space<vmem>>, %arg6: memref<2x8x128xf32, #tpu.memory_space<vmem>>, %arg7: memref<2x8x128xf32, #tpu.memory_space<vmem>>) attributes {dimension_semantics = [#tpu.dimension_semantics<parallel>, #tpu.dimension_semantics<parallel>, #tpu.dimension_semantics<parallel>, #tpu.dimension_semantics<arbitrary>], iteration_bounds = array<i64: 1, 1, 1, 1>, scalar_prefetch = 0 : i64, scratch_operands = 1 : i64, tpu.core_type = #tpu.core_type<tc>, window_params = [{transform_indices = @transform_0, window_bounds = array<i64: 2, 8, 128>}, {transform_indices = @transform_1, window_bounds = array<i64: 2, 128, 128>}, {transform_indices = @transform_2, window_bounds = array<i64: 2, 8, 128>}]} {
    %c0_i32 = arith.constant 0 : i32
    %0 = arith.cmpi eq, %arg3, %c0_i32 : i32
    %1 = arith.extui %0 : i1 to i32
    %c0_i32_0 = arith.constant 0 : i32
    %2 = arith.cmpi ne, %1, %c0_i32_0 : i32
    scf.if %2 {
      %cst_14 = arith.constant 0.000000e+00 : f32
      %12 = vector.broadcast %cst_14 : f32 to vector<2x8x128xf32>
      %c0_15 = arith.constant 0 : index
      %c0_16 = arith.constant 0 : index
      %c0_17 = arith.constant 0 : index
      %13 = vector.load %arg7[%c0_15, %c0_16, %c0_17] : memref<2x8x128xf32, #tpu.memory_space<vmem>>, vector<2x8x128xf32>
      tpu.vector_store %arg7[%c0_15, %c0_16, %c0_17], %12 {strides = array<i32>} : memref<2x8x128xf32, #tpu.memory_space<vmem>>, vector<2x8x128xf32>,
    } else {
    }
    %c0 = arith.constant 0 : index
    %c0_1 = arith.constant 0 : index
    %c0_2 = arith.constant 0 : index
    %3 = vector.load %arg7[%c0, %c0_1, %c0_2] : memref<2x8x128xf32, #tpu.memory_space<vmem>>, vector<2x8x128xf32>
    %c0_3 = arith.constant 0 : index
    %c0_4 = arith.constant 0 : index
    %c0_5 = arith.constant 0 : index
    %4 = vector.load %arg4[%c0_3, %c0_4, %c0_5] : memref<2x8x128xf32, #tpu.memory_space<vmem>>, vector<2x8x128xf32>
    %c0_6 = arith.constant 0 : index
    %c0_7 = arith.constant 0 : index
    %c0_8 = arith.constant 0 : index
    %5 = vector.load %arg5[%c0_6, %c0_7, %c0_8] : memref<2x128x128xf32, #tpu.memory_space<vmem>>, vector<2x128x128xf32>
    "tpu.trace_start"() <{level = 10 : i32, message = "bmk,bkn->bmn"}> : () -> ()
    %cst = arith.constant dense<0.000000e+00> : vector<2x8x128xf32>
    %6 = tpu.matmul %4, %5, %cst {dimension_numbers = #tpu.dot_dimension_numbers<[2], [1], [1], [2], [0, 0, 0, 1, 1, 2], [0], [0]>, precision = #tpu.contract_precision<fp32>} : vector<2x8x128xf32>, vector<2x128x128xf32>, vector<2x8x128xf32> -> vector<2x8x128xf32>
    "tpu.trace_stop"() : () -> ()
    %7 = arith.addf %3, %6 : vector<2x8x128xf32>
    %c0_9 = arith.constant 0 : index
    %c0_10 = arith.constant 0 : index
    %c0_11 = arith.constant 0 : index
    %8 = vector.load %arg7[%c0_9, %c0_10, %c0_11] : memref<2x8x128xf32, #tpu.memory_space<vmem>>, vector<2x8x128xf32>
    tpu.vector_store %arg7[%c0_9, %c0_10, %c0_11], %7 {strides = array<i32>} : memref<2x8x128xf32, #tpu.memory_space<vmem>>, vector<2x8x128xf32>,
    %c0_i32_12 = arith.constant 0 : i32
    %9 = arith.cmpi eq, %arg3, %c0_i32_12 : i32
    %10 = arith.extui %9 : i1 to i32
    %c0_i32_13 = arith.constant 0 : i32
    %11 = arith.cmpi ne, %10, %c0_i32_13 : i32
    scf.if %11 {
      %c0_14 = arith.constant 0 : index
      %c0_15 = arith.constant 0 : index
      %c0_16 = arith.constant 0 : index
      %12 = vector.load %arg7[%c0_14, %c0_15, %c0_16] : memref<2x8x128xf32, #tpu.memory_space<vmem>>, vector<2x8x128xf32>
      %c0_17 = arith.constant 0 : index
      %c0_18 = arith.constant 0 : index
      %c0_19 = arith.constant 0 : index
      %13 = vector.load %arg6[%c0_17, %c0_18, %c0_19] : memref<2x8x128xf32, #tpu.memory_space<vmem>>, vector<2x8x128xf32>
      tpu.vector_store %arg6[%c0_17, %c0_18, %c0_19], %12 {strides = array<i32>} : memref<2x8x128xf32, #tpu.memory_space<vmem>>, vector<2x8x128xf32>,
    } else {
    }
    return
  }
  func.func @transform_0(%arg0: i32, %arg1: i32, %arg2: i32, %arg3: i32) -> (i32, i32, i32) {
    %c0_i32 = arith.constant 0 : i32
    return %arg0, %arg1, %arg3 : i32, i32, i32
  }
  func.func @transform_1(%arg0: i32, %arg1: i32, %arg2: i32, %arg3: i32) -> (i32, i32, i32) {
    %c0_i32 = arith.constant 0 : i32
    return %arg0, %arg3, %arg2 : i32, i32, i32
  }
  func.func @transform_2(%arg0: i32, %arg1: i32, %arg2: i32, %arg3: i32) -> (i32, i32, i32) {
    %c0_i32 = arith.constant 0 : i32
    return %arg0, %arg1, %arg2 : i32, i32, i32
  }
}

</mosaic_0001>

<llo_original>
// kernel: tpu_custom_call.1
$region0: #{tpu_custom_call.1}
  #allocation0 [shape = 'u32[]', space=smem, size = 0x4, offset = 0x4, fixed_abs, tag = 'smem constant byte address 0x4 - core index']
  #allocation1 [shape = 'u32[144,128]{1,0:T(1,128)}', space=vmem, size = 0x12000, scoped, tag = 'internal scratch']
  #allocation2 [shape = 'f32[2,8,128]{2,1,0:T(8,128)}', space=vmem, size = 0x2000, scoped, tag = 'scratch operand']
  %s0 = inlined_call_operand.hbm [shape: f32[2,8,128], index: 0, kind: input, shape index: {}]
  %s1 = inlined_call_operand.hbm [shape: f32[2,128,128], index: 1, kind: input, shape index: {}]
  %s2 = inlined_call_operand.hbm [shape: f32[2,8,128], index: 2, kind: output, shape index: {}]
  %s3 = sld [smem:[#allocation0]]
  $region34: #{tpu_custom_call.1} parent=0
    _
  %s5 = ssub.s32 1, %s3
  %s6 = scalar_select 0, %s5, %s3
  $region1: #{tpu_custom_call.1} parent=0
    #allocation3 [shape = 'u8[8192]{0}', space=vmem, size = 0x2000, scoped, tag = 'input window, operand 0, single buffered']
    #allocation4 [shape = 's32[1]{0}', space=sflag, size = 0x4, scoped, tag = 'scoped memory for tpu_custom_call.1']
    #allocation5 [shape = 's32[1]{0}', space=sflag, size = 0x4, scoped, tag = 'scoped memory for tpu_custom_call.1']
    #allocation6 [shape = 'u8[131072]{0}', space=vmem, size = 0x20000, scoped, tag = 'input window, operand 1, single buffered']
    #allocation7 [shape = 's32[1]{0}', space=sflag, size = 0x4, scoped, tag = 'scoped memory for tpu_custom_call.1']
    #allocation8 [shape = 'u8[8192]{0}', space=vmem, size = 0x2000, scoped, tag = 'output window, operand 0, single buffered']
    %7 = vsyncpa [#allocation4], 0
    %8 = vsyncpa [#allocation7], 0
    %9 = vsyncpa [#allocation5], 0
    // Predicated region
    $region2: #{tpu_custom_call.1} parent=1 // pred_check
      _
    $region3: #{tpu_custom_call.1} parent=1 // pred_check_branch
      %11 = sbr.rel (0) target = $region5
    $region4: #{tpu_custom_call.1} parent=1 // pred_region
      %s13 = ssub.s32 256, 256
      %14 = vsyncadd [#allocation4], %s13
      %s15 = sshll.u32 [#allocation3], 4
      %s16 = int_to_ptr.vmem [resolvable:$true] %s15
      %21 = dma.hbm_to_vmem [thread:$0]  %s0, 256, %s16, [#allocation4], 128, 128, 8
    $region5: #{tpu_custom_call.1} parent=1 // pred_fallthru
      _
    // Predicated region
    $region6: #{tpu_custom_call.1} parent=1 // pred_check
      _
    $region7: #{tpu_custom_call.1} parent=1 // pred_check_branch
      %23 = sbr.rel (0) target = $region9
    $region8: #{tpu_custom_call.1} parent=1 // pred_region
      %s25 = ssub.s32 4096, 4096
      %26 = vsyncadd [#allocation7], %s25
      %s27 = sshll.u32 [#allocation6], 4
      %s28 = int_to_ptr.vmem [resolvable:$true] %s27
      %33 = dma.hbm_to_vmem [thread:$0]  %s1, 4096, %s28, [#allocation7], 128, 128, 8
    $region9: #{tpu_custom_call.1} parent=1 // pred_fallthru
      _
    // Predicated region
    $region10: #{tpu_custom_call.1} parent=1 // pred_check
      _
    $region11: #{tpu_custom_call.1} parent=1 // pred_check_branch
      %35 = sbr.rel (0) target = $region13
    $region12: #{tpu_custom_call.1} parent=1 // pred_region
      %36 = dma.done [#allocation4], 256
    $region13: #{tpu_custom_call.1} parent=1 // pred_fallthru
      _
    // Predicated region
    $region14: #{tpu_custom_call.1} parent=1 // pred_check
      _
    $region15: #{tpu_custom_call.1} parent=1 // pred_check_branch
      %38 = sbr.rel (0) target = $region17
    $region16: #{tpu_custom_call.1} parent=1 // pred_region
      %39 = dma.done [#allocation7], 4096
    $region17: #{tpu_custom_call.1} parent=1 // pred_fallthru
      _
    %p40 = scmp.eq.s32.totalorder 0, 0
    // Predicated region
    $region18: #{tpu_custom_call.1} parent=1 // pred_check
      %p41 = pneg %p40
    $region19: #{tpu_custom_call.1} parent=1 // pred_check_branch
      %43 = sbr.rel (%p41) target = $region21
    $region20: #{tpu_custom_call.1} parent=1 // pred_region
      %44 = vst [vmem:[#allocation2] sm:$0xff] 0.0
      %45 = vst [vmem:[#allocation2 + $0x8] sm:$0xff] 0.0
    $region21: #{tpu_custom_call.1} parent=1 // pred_fallthru
      _
    %v46 = vld [vmem:[#allocation2] sm:$0xff]
    %v47 = vld [vmem:[#allocation2 + $0x8] sm:$0xff]
    %v48 = vld [vmem:[#allocation3] sm:$0xff]
    %v49 = vld [vmem:[#allocation3 + $0x8] sm:$0xff]
    %v50 = vld [vmem:[#allocation6] sm:$0xff]
    %v51 = vld [vmem:[#allocation6 + $0x8] sm:$0xff]
    %v52 = vld [vmem:[#allocation6 + $0x10] sm:$0xff]
    %v53 = vld [vmem:[#allocation6 + $0x18] sm:$0xff]
    %v54 = vld [vmem:[#allocation6 + $0x20] sm:$0xff]
    %v55 = vld [vmem:[#allocation6 + $0x28] sm:$0xff]
    %v56 = vld [vmem:[#allocation6 + $0x30] sm:$0xff]
    %v57 = vld [vmem:[#allocation6 + $0x38] sm:$0xff]
    %v58 = vld [vmem:[#allocation6 + $0x40] sm:$0xff]
    %v59 = vld [vmem:[#allocation6 + $0x48] sm:$0xff]
    %v60 = vld [vmem:[#allocation6 + $0x50] sm:$0xff]
    %v61 = vld [vmem:[#allocation6 + $0x58] sm:$0xff]
    %v62 = vld [vmem:[#allocation6 + $0x60] sm:$0xff]
    %v63 = vld [vmem:[#allocation6 + $0x68] sm:$0xff]
    %v64 = vld [vmem:[#allocation6 + $0x70] sm:$0xff]
    %v65 = vld [vmem:[#allocation6 + $0x78] sm:$0xff]
    %v66 = vld [vmem:[#allocation6 + $0x80] sm:$0xff]
    %v67 = vld [vmem:[#allocation6 + $0x88] sm:$0xff]
    %v68 = vld [vmem:[#allocation6 + $0x90] sm:$0xff]
    %v69 = vld [vmem:[#allocation6 + $0x98] sm:$0xff]
    %v70 = vld [vmem:[#allocation6 + $0xa0] sm:$0xff]
    %v71 = vld [vmem:[#allocation6 + $0xa8] sm:$0xff]
    %v72 = vld [vmem:[#allocation6 + $0xb0] sm:$0xff]
    %v73 = vld [vmem:[#allocation6 + $0xb8] sm:$0xff]
    %v74 = vld [vmem:[#allocation6 + $0xc0] sm:$0xff]
    %v75 = vld [vmem:[#allocation6 + $0xc8] sm:$0xff]
    %v76 = vld [vmem:[#allocation6 + $0xd0] sm:$0xff]
    %v77 = vld [vmem:[#allocation6 + $0xd8] sm:$0xff]
    %v78 = vld [vmem:[#allocation6 + $0xe0] sm:$0xff]
    %v79 = vld [vmem:[#allocation6 + $0xe8] sm:$0xff]
    %v80 = vld [vmem:[#allocation6 + $0xf0] sm:$0xff]
    %v81 = vld [vmem:[#allocation6 + $0xf8] sm:$0xff]
    %82 = vmatprep.subr.mxu0 0.0
    %v83 = vand.u32 %v50, 4294901760
    %84 = vmatpush1.msra.mxu0 %v83
    %85 = vmatprep.subr.mxu0 0.0
    %v86 = vand.u32 %v51, 4294901760
    %87 = vmatpush1.msra.mxu0 %v86
    %88 = vmatprep.subr.mxu0 0.0
    %v89 = vand.u32 %v52, 4294901760
    %90 = vmatpush1.msra.mxu0 %v89
    %91 = vmatprep.subr.mxu0 0.0
    %v92 = vand.u32 %v53, 4294901760
    %93 = vmatpush1.msra.mxu0 %v92
    %94 = vmatprep.subr.mxu0 0.0
    %v95 = vand.u32 %v54, 4294901760
    %96 = vmatpush1.msra.mxu0 %v95
    %97 = vmatprep.subr.mxu0 0.0
    %v98 = vand.u32 %v55, 4294901760
    %99 = vmatpush1.msra.mxu0 %v98
    %100 = vmatprep.subr.mxu0 0.0
    %v101 = vand.u32 %v56, 4294901760
    %102 = vmatpush1.msra.mxu0 %v101
    %103 = vmatprep.subr.mxu0 0.0
    %v104 = vand.u32 %v57, 4294901760
    %105 = vmatpush1.msra.mxu0 %v104
    %106 = vmatprep.subr.mxu0 0.0
    %v107 = vand.u32 %v58, 4294901760
    %108 = vmatpush1.msra.mxu0 %v107
    %109 = vmatprep.subr.mxu0 0.0
    %v110 = vand.u32 %v59, 4294901760
    %111 = vmatpush1.msra.mxu0 %v110
    %112 = vmatprep.subr.mxu0 0.0
    %v113 = vand.u32 %v60, 4294901760
    %114 = vmatpush1.msra.mxu0 %v113
    %115 = vmatprep.subr.mxu0 0.0
    %v116 = vand.u32 %v61, 4294901760
    %117 = vmatpush1.msra.mxu0 %v116
    %118 = vmatprep.subr.mxu0 0.0
    %v119 = vand.u32 %v62, 4294901760
    %120 = vmatpush1.msra.mxu0 %v119
    %121 = vmatprep.subr.mxu0 0.0
    %v122 = vand.u32 %v63, 4294901760
    %123 = vmatpush1.msra.mxu0 %v122
    %124 = vmatprep.subr.mxu0 0.0
    %v125 = vand.u32 %v64, 4294901760
    %126 = vmatpush1.msra.mxu0 %v125
    %127 = vmatprep.subr.mxu0 0.0
    %v128 = vand.u32 %v65, 4294901760
    %129 = vmatpush1.msra.mxu0 %v128
    %130 = vmatprep.subr.mxu0 0.0
    %131 = vmatpush1.msra.mxu0 0.0
    %132 = vmatprep.subr.mxu0 0.0
    %133 = vmatpush1.msra.mxu0 0.0
    %134 = vmatprep.subr.mxu0 0.0
    %135 = vmatpush1.msra.mxu0 0.0
    %136 = vmatprep.subr.mxu0 0.0
    %137 = vmatpush1.msra.mxu0 0.0
    %138 = vmatprep.subr.mxu0 0.0
    %139 = vmatpush1.msra.mxu0 0.0
    %140 = vmatprep.subr.mxu0 0.0
    %141 = vmatpush1.msra.mxu0 0.0
    %142 = vmatprep.subr.mxu0 0.0
    %143 = vmatpush1.msra.mxu0 0.0
    %144 = vmatprep.subr.mxu0 0.0
    %145 = vmatpush1.msra.mxu0 0.0
    %146 = vmatprep.subr.mxu0 0.0
    %147 = vmatpush1.msra.mxu0 0.0
    %148 = vmatprep.subr.mxu0 0.0
    %149 = vmatpush1.msra.mxu0 0.0
    %150 = vmatprep.subr.mxu0 0.0
    %151 = vmatpush1.msra.mxu0 0.0
    %152 = vmatprep.subr.mxu0 0.0
    %153 = vmatpush1.msra.mxu0 0.0
    %154 = vmatprep.subr.mxu0 0.0
    %155 = vmatpush1.msra.mxu0 0.0
    %156 = vmatprep.subr.mxu0 0.0
    %157 = vmatpush1.msra.mxu0 0.0
    %158 = vmatprep.subr.mxu0 0.0
    %159 = vmatpush1.msra.mxu0 0.0
    %160 = vmatprep.subr.mxu0 0.0
    %161 = vmatpush1.msra.mxu0 0.0
    %162 = vmatprep.mubr.f32.mxu0 0.0
    %v163 = vand.u32 %v48, 4294901760
    %v164 = vsub.f32 %v48, %v163
    %v165 = vand.u32 %v164, 4294901760
    %v166 = vsub.f32 %v164, %v165
    %v167 = vand.u32 %v166, 4294901760
    %168 = vmatmul.mubr.f32.gmra.mrb[0].mxu0 %v167
    %v169 = vpop.f32.mrb[0].mxu0
    %v170 = vadd.f32 0.0, %v169
    %v171 = vpop.f32.mrb[0].mxu0
    %172 = vdwg.mxu0
    %173 = vmatprep.subr.mxu0 0.0
    %v174 = vand.u32 %v50, 4294901760
    %v175 = vsub.f32 %v50, %v174
    %v176 = vand.u32 %v175, 4294901760
    %v177 = vsub.f32 %v175, %v176
    %v178 = vand.u32 %v177, 4294901760
    %179 = vmatpush1.msra.mxu0 %v178
    %180 = vmatprep.subr.mxu0 0.0
    %v181 = vand.u32 %v51, 4294901760
    %v182 = vsub.f32 %v51, %v181
    %v183 = vand.u32 %v182, 4294901760
    %v184 = vsub.f32 %v182, %v183
    %v185 = vand.u32 %v184, 4294901760
    %186 = vmatpush1.msra.mxu0 %v185
    %187 = vmatprep.subr.mxu0 0.0
    %v188 = vand.u32 %v52, 4294901760
    %v189 = vsub.f32 %v52, %v188
    %v190 = vand.u32 %v189, 4294901760
    %v191 = vsub.f32 %v189, %v190
    %v192 = vand.u32 %v191, 4294901760
    %193 = vmatpush1.msra.mxu0 %v192
    %194 = vmatprep.subr.mxu0 0.0
    %v195 = vand.u32 %v53, 4294901760
    %v196 = vsub.f32 %v53, %v195
    %v197 = vand.u32 %v196, 4294901760
    %v198 = vsub.f32 %v196, %v197
    %v199 = vand.u32 %v198, 4294901760
    %200 = vmatpush1.msra.mxu0 %v199
    %201 = vmatprep.subr.mxu0 0.0
    %v202 = vand.u32 %v54, 4294901760
    %v203 = vsub.f32 %v54, %v202
    %v204 = vand.u32 %v203, 4294901760
    %v205 = vsub.f32 %v203, %v204
    %v206 = vand.u32 %v205, 4294901760
    %207 = vmatpush1.msra.mxu0 %v206
    %208 = vmatprep.subr.mxu0 0.0
    %v209 = vand.u32 %v55, 4294901760
    %v210 = vsub.f32 %v55, %v209
    %v211 = vand.u32 %v210, 4294901760
    %v212 = vsub.f32 %v210, %v211
    %v213 = vand.u32 %v212, 4294901760
    %214 = vmatpush1.msra.mxu0 %v213
    %215 = vmatprep.subr.mxu0 0.0
    %v216 = vand.u32 %v56, 4294901760
    %v217 = vsub.f32 %v56, %v216
    %v218 = vand.u32 %v217, 4294901760
    %v219 = vsub.f32 %v217, %v218
    %v220 = vand.u32 %v219, 4294901760
    %221 = vmatpush1.msra.mxu0 %v220
    %222 = vmatprep.subr.mxu0 0.0
    %v223 = vand.u32 %v57, 4294901760
    %v224 = vsub.f32 %v57, %v223
    %v225 = vand.u32 %v224, 4294901760
    %v226 = vsub.f32 %v224, %v225
    %v227 = vand.u32 %v226, 4294901760
    %228 = vmatpush1.msra.mxu0 %v227
    %229 = vmatprep.subr.mxu0 0.0
    %v230 = vand.u32 %v58, 4294901760
    %v231 = vsub.f32 %v58, %v230
    %v232 = vand.u32 %v231, 4294901760
    %v233 = vsub.f32 %v231, %v232
    %v234 = vand.u32 %v233, 4294901760
    %235 = vmatpush1.msra.mxu0 %v234
    %236 = vmatprep.subr.mxu0 0.0
    %v237 = vand.u32 %v59, 4294901760
    %v238 = vsub.f32 %v59, %v237
    %v239 = vand.u32 %v238, 4294901760
    %v240 = vsub.f32 %v238, %v239
    %v241 = vand.u32 %v240, 4294901760
    %242 = vmatpush1.msra.mxu0 %v241
    %243 = vmatprep.subr.mxu0 0.0
    %v244 = vand.u32 %v60, 4294901760
    %v245 = vsub.f32 %v60, %v244
    %v246 = vand.u32 %v245, 4294901760
    %v247 = vsub.f32 %v245, %v246
    %v248 = vand.u32 %v247, 4294901760
    %249 = vmatpush1.msra.mxu0 %v248
    %250 = vmatprep.subr.mxu0 0.0
    %v251 = vand.u32 %v61, 4294901760
    %v252 = vsub.f32 %v61, %v251
    %v253 = vand.u32 %v252, 4294901760
    %v254 = vsub.f32 %v252, %v253
    %v255 = vand.u32 %v254, 4294901760
    %256 = vmatpush1.msra.mxu0 %v255
    %257 = vmatprep.subr.mxu0 0.0
    %v258 = vand.u32 %v62, 4294901760
    %v259 = vsub.f32 %v62, %v258
    %v260 = vand.u32 %v259, 4294901760
    %v261 = vsub.f32 %v259, %v260
    %v262 = vand.u32 %v261, 4294901760
    %263 = vmatpush1.msra.mxu0 %v262
    %264 = vmatprep.subr.mxu0 0.0
    %v265 = vand.u32 %v63, 4294901760
    %v266 = vsub.f32 %v63, %v265
    %v267 = vand.u32 %v266, 4294901760
    %v268 = vsub.f32 %v266, %v267
    %v269 = vand.u32 %v268, 4294901760
    %270 = vmatpush1.msra.mxu0 %v269
    %271 = vmatprep.subr.mxu0 0.0
    %v272 = vand.u32 %v64, 4294901760
    %v273 = vsub.f32 %v64, %v272
    %v274 = vand.u32 %v273, 4294901760
    %v275 = vsub.f32 %v273, %v274
    %v276 = vand.u32 %v275, 4294901760
    %277 = vmatpush1.msra.mxu0 %v276
    %278 = vmatprep.subr.mxu0 0.0
    %v279 = vand.u32 %v65, 4294901760
    %v280 = vsub.f32 %v65, %v279
    %v281 = vand.u32 %v280, 4294901760
    %v282 = vsub.f32 %v280, %v281
    %v283 = vand.u32 %v282, 4294901760
    %284 = vmatpush1.msra.mxu0 %v283
    %285 = vmatprep.subr.mxu0 0.0
    %286 = vmatpush1.msra.mxu0 0.0
    %287 = vmatprep.subr.mxu0 0.0
    %288 = vmatpush1.msra.mxu0 0.0
    %289 = vmatprep.subr.mxu0 0.0
    %290 = vmatpush1.msra.mxu0 0.0
    %291 = vmatprep.subr.mxu0 0.0
    %292 = vmatpush1.msra.mxu0 0.0
    %293 = vmatprep.subr.mxu0 0.0
    %294 = vmatpush1.msra.mxu0 0.0
    %295 = vmatprep.subr.mxu0 0.0
    %296 = vmatpush1.msra.mxu0 0.0
    %297 = vmatprep.subr.mxu0 0.0
    %298 = vmatpush1.msra.mxu0 0.0
    %299 = vmatprep.subr.mxu0 0.0
    %300 = vmatpush1.msra.mxu0 0.0
    %301 = vmatprep.subr.mxu0 0.0
    %302 = vmatpush1.msra.mxu0 0.0
    %303 = vmatprep.subr.mxu0 0.0
    %304 = vmatpush1.msra.mxu0 0.0
    %305 = vmatprep.subr.mxu0 0.0
    %306 = vmatpush1.msra.mxu0 0.0
    %307 = vmatprep.subr.mxu0 0.0
    %308 = vmatpush1.msra.mxu0 0.0
    %309 = vmatprep.subr.mxu0 0.0
    %310 = vmatpush1.msra.mxu0 0.0
    %311 = vmatprep.subr.mxu0 0.0
    %312 = vmatpush1.msra.mxu0 0.0
    %313 = vmatprep.subr.mxu0 0.0
    %314 = vmatpush1.msra.mxu0 0.0
    %315 = vmatprep.subr.mxu0 0.0
    %316 = vmatpush1.msra.mxu0 0.0
    %317 = vmatprep.mubr.f32.mxu0 0.0
    %v318 = vand.u32 %v48, 4294901760
    %319 = vmatmul.mubr.f32.gmra.mrb[0].mxu0 %v318
    %v320 = vpop.f32.mrb[0].mxu0
    %v321 = vadd.f32 %v170, %v320
    %v322 = vpop.f32.mrb[0].mxu0
    %323 = vdwg.mxu0
    %324 = vmatprep.subr.mxu0 0.0
    %v325 = vand.u32 %v50, 4294901760
    %v326 = vsub.f32 %v50, %v325
    %327 = vmatpush1.msra.mxu0 %v326
    %328 = vmatprep.subr.mxu0 0.0
    %v329 = vand.u32 %v51, 4294901760
    %v330 = vsub.f32 %v51, %v329
    %331 = vmatpush1.msra.mxu0 %v330
    %332 = vmatprep.subr.mxu0 0.0
    %v333 = vand.u32 %v52, 4294901760
    %v334 = vsub.f32 %v52, %v333
    %335 = vmatpush1.msra.mxu0 %v334
    %336 = vmatprep.subr.mxu0 0.0
    %v337 = vand.u32 %v53, 4294901760
    %v338 = vsub.f32 %v53, %v337
    %339 = vmatpush1.msra.mxu0 %v338
    %340 = vmatprep.subr.mxu0 0.0
    %v341 = vand.u32 %v54, 4294901760
    %v342 = vsub.f32 %v54, %v341
    %343 = vmatpush1.msra.mxu0 %v342
    %344 = vmatprep.subr.mxu0 0.0
    %v345 = vand.u32 %v55, 4294901760
    %v346 = vsub.f32 %v55, %v345
    %347 = vmatpush1.msra.mxu0 %v346
    %348 = vmatprep.subr.mxu0 0.0
    %v349 = vand.u32 %v56, 4294901760
    %v350 = vsub.f32 %v56, %v349
    %351 = vmatpush1.msra.mxu0 %v350
    %352 = vmatprep.subr.mxu0 0.0
    %v353 = vand.u32 %v57, 4294901760
    %v354 = vsub.f32 %v57, %v353
    %355 = vmatpush1.msra.mxu0 %v354
    %356 = vmatprep.subr.mxu0 0.0
    %v357 = vand.u32 %v58, 4294901760
    %v358 = vsub.f32 %v58, %v357
    %359 = vmatpush1.msra.mxu0 %v358
    %360 = vmatprep.subr.mxu0 0.0
    %v361 = vand.u32 %v59, 4294901760
    %v362 = vsub.f32 %v59, %v361
    %363 = vmatpush1.msra.mxu0 %v362
    %364 = vmatprep.subr.mxu0 0.0
    %v365 = vand.u32 %v60, 4294901760
    %v366 = vsub.f32 %v60, %v365
    %367 = vmatpush1.msra.mxu0 %v366
    %368 = vmatprep.subr.mxu0 0.0
    %v369 = vand.u32 %v61, 4294901760
    %v370 = vsub.f32 %v61, %v369
    %371 = vmatpush1.msra.mxu0 %v370
    %372 = vmatprep.subr.mxu0 0.0
    %v373 = vand.u32 %v62, 4294901760
    %v374 = vsub.f32 %v62, %v373
    %375 = vmatpush1.msra.mxu0 %v374
    %376 = vmatprep.subr.mxu0 0.0
    %v377 = vand.u32 %v63, 4294901760
    %v378 = vsub.f32 %v63, %v377
    %379 = vmatpush1.msra.mxu0 %v378
    %380 = vmatprep.subr.mxu0 0.0
    %v381 = vand.u32 %v64, 4294901760
    %v382 = vsub.f32 %v64, %v381
    %383 = vmatpush1.msra.mxu0 %v382
    %384 = vmatprep.subr.mxu0 0.0
    %v385 = vand.u32 %v65, 4294901760
    %v386 = vsub.f32 %v65, %v385
    %387 = vmatpush1.msra.mxu0 %v386
    %388 = vmatprep.subr.mxu0 0.0
    %389 = vmatpush1.msra.mxu0 0.0
    %390 = vmatprep.subr.mxu0 0.0
    %391 = vmatpush1.msra.mxu0 0.0
    %392 = vmatprep.subr.mxu0 0.0
    %393 = vmatpush1.msra.mxu0 0.0
    %394 = vmatprep.subr.mxu0 0.0
    %395 = vmatpush1.msra.mxu0 0.0
    %396 = vmatprep.subr.mxu0 0.0
    %397 = vmatpush1.msra.mxu0 0.0
    %398 = vmatprep.subr.mxu0 0.0
    %399 = vmatpush1.msra.mxu0 0.0
    %400 = vmatprep.subr.mxu0 0.0
    %401 = vmatpush1.msra.mxu0 0.0
    %402 = vmatprep.subr.mxu0 0.0
    %403 = vmatpush1.msra.mxu0 0.0
    %404 = vmatprep.subr.mxu0 0.0
    %405 = vmatpush1.msra.mxu0 0.0
    %406 = vmatprep.subr.mxu0 0.0
    %407 = vmatpush1.msra.mxu0 0.0
    %408 = vmatprep.subr.mxu0 0.0
    %409 = vmatpush1.msra.mxu0 0.0
    %410 = vmatprep.subr.mxu0 0.0
    %411 = vmatpush1.msra.mxu0 0.0
    %412 = vmatprep.subr.mxu0 0.0
    %413 = vmatpush1.msra.mxu0 0.0
    %414 = vmatprep.subr.mxu0 0.0
    %415 = vmatpush1.msra.mxu0 0.0
    %416 = vmatprep.subr.mxu0 0.0
    %417 = vmatpush1.msra.mxu0 0.0
    %418 = vmatprep.subr.mxu0 0.0
    %419 = vmatpush1.msra.mxu0 0.0
    %420 = vmatprep.mubr.f32.mxu0 0.0
    %v421 = vand.u32 %v48, 4294901760
    %v422 = vsub.f32 %v48, %v421
    %423 = vmatmul.mubr.f32.gmra.mrb[0].mxu0 %v422
    %v424 = vpop.f32.mrb[0].mxu0
    %v425 = vadd.f32 %v321, %v424
    %v426 = vpop.f32.mrb[0].mxu0
    %427 = vdwg.mxu0
    %428 = vmatprep.subr.mxu0 0.0
    %v429 = vand.u32 %v50, 4294901760
    %430 = vmatpush1.msra.mxu0 %v429
    %431 = vmatprep.subr.mxu0 0.0
    %v432 = vand.u32 %v51, 4294901760
    %433 = vmatpush1.msra.mxu0 %v432
    %434 = vmatprep.subr.mxu0 0.0
    %v435 = vand.u32 %v52, 4294901760
    %436 = vmatpush1.msra.mxu0 %v435
    %437 = vmatprep.subr.mxu0 0.0
    %v438 = vand.u32 %v53, 4294901760
    %439 = vmatpush1.msra.mxu0 %v438
    %440 = vmatprep.subr.mxu0 0.0
    %v441 = vand.u32 %v54, 4294901760
    %442 = vmatpush1.msra.mxu0 %v441
    %443 = vmatprep.subr.mxu0 0.0
    %v444 = vand.u32 %v55, 4294901760
    %445 = vmatpush1.msra.mxu0 %v444
    %446 = vmatprep.subr.mxu0 0.0
    %v447 = vand.u32 %v56, 4294901760
    %448 = vmatpush1.msra.mxu0 %v447
    %449 = vmatprep.subr.mxu0 0.0
    %v450 = vand.u32 %v57, 4294901760
    %451 = vmatpush1.msra.mxu0 %v450
    %452 = vmatprep.subr.mxu0 0.0
    %v453 = vand.u32 %v58, 4294901760
    %454 = vmatpush1.msra.mxu0 %v453
    %455 = vmatprep.subr.mxu0 0.0
    %v456 = vand.u32 %v59, 4294901760
    %457 = vmatpush1.msra.mxu0 %v456
    %458 = vmatprep.subr.mxu0 0.0
    %v459 = vand.u32 %v60, 4294901760
    %460 = vmatpush1.msra.mxu0 %v459
    %461 = vmatprep.subr.mxu0 0.0
    %v462 = vand.u32 %v61, 4294901760
    %463 = vmatpush1.msra.mxu0 %v462
    %464 = vmatprep.subr.mxu0 0.0
    %v465 = vand.u32 %v62, 4294901760
    %466 = vmatpush1.msra.mxu0 %v465
    %467 = vmatprep.subr.mxu0 0.0
    %v468 = vand.u32 %v63, 4294901760
    %469 = vmatpush1.msra.mxu0 %v468
    %470 = vmatprep.subr.mxu0 0.0
    %v471 = vand.u32 %v64, 4294901760
    %472 = vmatpush1.msra.mxu0 %v471
    %473 = vmatprep.subr.mxu0 0.0
    %v474 = vand.u32 %v65, 4294901760
    %475 = vmatpush1.msra.mxu0 %v474
    %476 = vmatprep.subr.mxu0 0.0
    %477 = vmatpush1.msra.mxu0 0.0
    %478 = vmatprep.subr.mxu0 0.0
    %479 = vmatpush1.msra.mxu0 0.0
    %480 = vmatprep.subr.mxu0 0.0
    %481 = vmatpush1.msra.mxu0 0.0
    %482 = vmatprep.subr.mxu0 0.0
    %483 = vmatpush1.msra.mxu0 0.0
    %484 = vmatprep.subr.mxu0 0.0
    %485 = vmatpush1.msra.mxu0 0.0
    %486 = vmatprep.subr.mxu0 0.0
    %487 = vmatpush1.msra.mxu0 0.0
    %488 = vmatprep.subr.mxu0 0.0
    %489 = vmatpush1.msra.mxu0 0.0
    %490 = vmatprep.subr.mxu0 0.0
    %491 = vmatpush1.msra.mxu0 0.0
    %492 = vmatprep.subr.mxu0 0.0
    %493 = vmatpush1.msra.mxu0 0.0
    %494 = vmatprep.subr.mxu0 0.0
    %495 = vmatpush1.msra.mxu0 0.0
    %496 = vmatprep.subr.mxu0 0.0
    %497 = vmatpush1.msra.mxu0 0.0
    %498 = vmatprep.subr.mxu0 0.0
    %499 = vmatpush1.msra.mxu0 0.0
    %500 = vmatprep.subr.mxu0 0.0
    %501 = vmatpush1.msra.mxu0 0.0
    %502 = vmatprep.subr.mxu0 0.0
    %503 = vmatpush1.msra.mxu0 0.0
    %504 = vmatprep.subr.mxu0 0.0
    %505 = vmatpush1.msra.mxu0 0.0
    %506 = vmatprep.subr.mxu0 0.0
    %507 = vmatpush1.msra.mxu0 0.0
    %508 = vmatprep.mubr.f32.mxu0 0.0
    %v509 = vand.u32 %v48, 4294901760
    %v510 = vsub.f32 %v48, %v509
    %v511 = vand.u32 %v510, 4294901760
    %512 = vmatmul.mubr.f32.gmra.mrb[0].mxu0 %v511
    %v513 = vpop.f32.mrb[0].mxu0
    %v514 = vadd.f32 %v425, %v513
    %v515 = vpop.f32.mrb[0].mxu0
    %516 = vdwg.mxu0
    %517 = vmatprep.subr.mxu0 0.0
    %v518 = vand.u32 %v50, 4294901760
    %v519 = vsub.f32 %v50, %v518
    %v520 = vand.u32 %v519, 4294901760
    %521 = vmatpush1.msra.mxu0 %v520
    %522 = vmatprep.subr.mxu0 0.0
    %v523 = vand.u32 %v51, 4294901760
    %v524 = vsub.f32 %v51, %v523
    %v525 = vand.u32 %v524, 4294901760
    %526 = vmatpush1.msra.mxu0 %v525
    %527 = vmatprep.subr.mxu0 0.0
    %v528 = vand.u32 %v52, 4294901760
    %v529 = vsub.f32 %v52, %v528
    %v530 = vand.u32 %v529, 4294901760
    %531 = vmatpush1.msra.mxu0 %v530
    %532 = vmatprep.subr.mxu0 0.0
    %v533 = vand.u32 %v53, 4294901760
    %v534 = vsub.f32 %v53, %v533
    %v535 = vand.u32 %v534, 4294901760
    %536 = vmatpush1.msra.mxu0 %v535
    %537 = vmatprep.subr.mxu0 0.0
    %v538 = vand.u32 %v54, 4294901760
    %v539 = vsub.f32 %v54, %v538
    %v540 = vand.u32 %v539, 4294901760
    %541 = vmatpush1.msra.mxu0 %v540
    %542 = vmatprep.subr.mxu0 0.0
    %v543 = vand.u32 %v55, 4294901760
    %v544 = vsub.f32 %v55, %v543
    %v545 = vand.u32 %v544, 4294901760
    %546 = vmatpush1.msra.mxu0 %v545
    %547 = vmatprep.subr.mxu0 0.0
    %v548 = vand.u32 %v56, 4294901760
    %v549 = vsub.f32 %v56, %v548
    %v550 = vand.u32 %v549, 4294901760
    %551 = vmatpush1.msra.mxu0 %v550
    %552 = vmatprep.subr.mxu0 0.0
    %v553 = vand.u32 %v57, 4294901760
    %v554 = vsub.f32 %v57, %v553
    %v555 = vand.u32 %v554, 4294901760
    %556 = vmatpush1.msra.mxu0 %v555
    %557 = vmatprep.subr.mxu0 0.0
    %v558 = vand.u32 %v58, 4294901760
    %v559 = vsub.f32 %v58, %v558
    %v560 = vand.u32 %v559, 4294901760
    %561 = vmatpush1.msra.mxu0 %v560
    %562 = vmatprep.subr.mxu0 0.0
    %v563 = vand.u32 %v59, 4294901760
    %v564 = vsub.f32 %v59, %v563
    %v565 = vand.u32 %v564, 4294901760
    %566 = vmatpush1.msra.mxu0 %v565
    %567 = vmatprep.subr.mxu0 0.0
    %v568 = vand.u32 %v60, 4294901760
    %v569 = vsub.f32 %v60, %v568
    %v570 = vand.u32 %v569, 4294901760
    %571 = vmatpush1.msra.mxu0 %v570
    %572 = vmatprep.subr.mxu0 0.0
    %v573 = vand.u32 %v61, 4294901760
    %v574 = vsub.f32 %v61, %v573
    %v575 = vand.u32 %v574, 4294901760
    %576 = vmatpush1.msra.mxu0 %v575
    %577 = vmatprep.subr.mxu0 0.0
    %v578 = vand.u32 %v62, 4294901760
    %v579 = vsub.f32 %v62, %v578
    %v580 = vand.u32 %v579, 4294901760
    %581 = vmatpush1.msra.mxu0 %v580
    %582 = vmatprep.subr.mxu0 0.0
    %v583 = vand.u32 %v63, 4294901760
    %v584 = vsub.f32 %v63, %v583
    %v585 = vand.u32 %v584, 4294901760
    %586 = vmatpush1.msra.mxu0 %v585
    %587 = vmatprep.subr.mxu0 0.0
    %v588 = vand.u32 %v64, 4294901760
    %v589 = vsub.f32 %v64, %v588
    %v590 = vand.u32 %v589, 4294901760
    %591 = vmatpush1.msra.mxu0 %v590
    %592 = vmatprep.subr.mxu0 0.0
    %v593 = vand.u32 %v65, 4294901760
    %v594 = vsub.f32 %v65, %v593
    %v595 = vand.u32 %v594, 4294901760
    %596 = vmatpush1.msra.mxu0 %v595
    %597 = vmatprep.subr.mxu0 0.0
    %598 = vmatpush1.msra.mxu0 0.0
    %599 = vmatprep.subr.mxu0 0.0
    %600 = vmatpush1.msra.mxu0 0.0
    %601 = vmatprep.subr.mxu0 0.0
    %602 = vmatpush1.msra.mxu0 0.0
    %603 = vmatprep.subr.mxu0 0.0
    %604 = vmatpush1.msra.mxu0 0.0
    %605 = vmatprep.subr.mxu0 0.0
    %606 = vmatpush1.msra.mxu0 0.0
    %607 = vmatprep.subr.mxu0 0.0
    %608 = vmatpush1.msra.mxu0 0.0
    %609 = vmatprep.subr.mxu0 0.0
    %610 = vmatpush1.msra.mxu0 0.0
    %611 = vmatprep.subr.mxu0 0.0
    %612 = vmatpush1.msra.mxu0 0.0
    %613 = vmatprep.subr.mxu0 0.0
    %614 = vmatpush1.msra.mxu0 0.0
    %615 = vmatprep.subr.mxu0 0.0
    %616 = vmatpush1.msra.mxu0 0.0
    %617 = vmatprep.subr.mxu0 0.0
    %618 = vmatpush1.msra.mxu0 0.0
    %619 = vmatprep.subr.mxu0 0.0
    %620 = vmatpush1.msra.mxu0 0.0
    %621 = vmatprep.subr.mxu0 0.0
    %622 = vmatpush1.msra.mxu0 0.0
    %623 = vmatprep.subr.mxu0 0.0
    %624 = vmatpush1.msra.mxu0 0.0
    %625 = vmatprep.subr.mxu0 0.0
    %626 = vmatpush1.msra.mxu0 0.0
    %627 = vmatprep.subr.mxu0 0.0
    %628 = vmatpush1.msra.mxu0 0.0
    %629 = vmatprep.mubr.f32.mxu0 0.0
    %v630 = vand.u32 %v48, 4294901760
    %631 = vmatmul.mubr.f32.gmra.mrb[0].mxu0 %v630
    %v632 = vpop.f32.mrb[0].mxu0
    %v633 = vadd.f32 %v514, %v632
    %v634 = vpop.f32.mrb[0].mxu0
    %635 = vdwg.mxu0
    %636 = vmatprep.subr.mxu0 0.0
    %v637 = vand.u32 %v50, 4294901760
    %638 = vmatpush1.msra.mxu0 %v637
    %639 = vmatprep.subr.mxu0 0.0
    %v640 = vand.u32 %v51, 4294901760
    %641 = vmatpush1.msra.mxu0 %v640
    %642 = vmatprep.subr.mxu0 0.0
    %v643 = vand.u32 %v52, 4294901760
    %644 = vmatpush1.msra.mxu0 %v643
    %645 = vmatprep.subr.mxu0 0.0
    %v646 = vand.u32 %v53, 4294901760
    %647 = vmatpush1.msra.mxu0 %v646
    %648 = vmatprep.subr.mxu0 0.0
    %v649 = vand.u32 %v54, 4294901760
    %650 = vmatpush1.msra.mxu0 %v649
    %651 = vmatprep.subr.mxu0 0.0
    %v652 = vand.u32 %v55, 4294901760
    %653 = vmatpush1.msra.mxu0 %v652
    %654 = vmatprep.subr.mxu0 0.0
    %v655 = vand.u32 %v56, 4294901760
    %656 = vmatpush1.msra.mxu0 %v655
    %657 = vmatprep.subr.mxu0 0.0
    %v658 = vand.u32 %v57, 4294901760
    %659 = vmatpush1.msra.mxu0 %v658
    %660 = vmatprep.subr.mxu0 0.0
    %v661 = vand.u32 %v58, 4294901760
    %662 = vmatpush1.msra.mxu0 %v661
    %663 = vmatprep.subr.mxu0 0.0
    %v664 = vand.u32 %v59, 4294901760
    %665 = vmatpush1.msra.mxu0 %v664
    %666 = vmatprep.subr.mxu0 0.0
    %v667 = vand.u32 %v60, 4294901760
    %668 = vmatpush1.msra.mxu0 %v667
    %669 = vmatprep.subr.mxu0 0.0
    %v670 = vand.u32 %v61, 4294901760
    %671 = vmatpush1.msra.mxu0 %v670
    %672 = vmatprep.subr.mxu0 0.0
    %v673 = vand.u32 %v62, 4294901760
    %674 = vmatpush1.msra.mxu0 %v673
    %675 = vmatprep.subr.mxu0 0.0
    %v676 = vand.u32 %v63, 4294901760
    %677 = vmatpush1.msra.mxu0 %v676
    %678 = vmatprep.subr.mxu0 0.0
    %v679 = vand.u32 %v64, 4294901760
    %680 = vmatpush1.msra.mxu0 %v679
    %681 = vmatprep.subr.mxu0 0.0
    %v682 = vand.u32 %v65, 4294901760
    %683 = vmatpush1.msra.mxu0 %v682
    %684 = vmatprep.subr.mxu0 0.0
    %685 = vmatpush1.msra.mxu0 0.0
    %686 = vmatprep.subr.mxu0 0.0
    %687 = vmatpush1.msra.mxu0 0.0
    %688 = vmatprep.subr.mxu0 0.0
    %689 = vmatpush1.msra.mxu0 0.0
    %690 = vmatprep.subr.mxu0 0.0
    %691 = vmatpush1.msra.mxu0 0.0
    %692 = vmatprep.subr.mxu0 0.0
    %693 = vmatpush1.msra.mxu0 0.0
    %694 = vmatprep.subr.mxu0 0.0
    %695 = vmatpush1.msra.mxu0 0.0
    %696 = vmatprep.subr.mxu0 0.0
    %697 = vmatpush1.msra.mxu0 0.0
    %698 = vmatprep.subr.mxu0 0.0
    %699 = vmatpush1.msra.mxu0 0.0
    %700 = vmatprep.subr.mxu0 0.0
    %701 = vmatpush1.msra.mxu0 0.0
    %702 = vmatprep.subr.mxu0 0.0
    %703 = vmatpush1.msra.mxu0 0.0
    %704 = vmatprep.subr.mxu0 0.0
    %705 = vmatpush1.msra.mxu0 0.0
    %706 = vmatprep.subr.mxu0 0.0
    %707 = vmatpush1.msra.mxu0 0.0
    %708 = vmatprep.subr.mxu0 0.0
    %709 = vmatpush1.msra.mxu0 0.0
    %710 = vmatprep.subr.mxu0 0.0
    %711 = vmatpush1.msra.mxu0 0.0
    %712 = vmatprep.subr.mxu0 0.0
    %713 = vmatpush1.msra.mxu0 0.0
    %714 = vmatprep.subr.mxu0 0.0
    %715 = vmatpush1.msra.mxu0 0.0
    %716 = vmatprep.mubr.f32.mxu0 0.0
    %v717 = vand.u32 %v48, 4294901760
    %718 = vmatmul.mubr.f32.gmra.mrb[0].mxu0 %v717
    %v719 = vpop.f32.mrb[0].mxu0
    %v720 = vadd.f32 %v633, %v719
    %v721 = vpop.f32.mrb[0].mxu0
    %722 = vdwg.mxu0
    %723 = vmatprep.subr.mxu0 0.0
    %v724 = vand.u32 %v66, 4294901760
    %725 = vmatpush1.msra.mxu0 %v724
    %726 = vmatprep.subr.mxu0 0.0
    %v727 = vand.u32 %v67, 4294901760
    %728 = vmatpush1.msra.mxu0 %v727
    %729 = vmatprep.subr.mxu0 0.0
    %v730 = vand.u32 %v68, 4294901760
    %731 = vmatpush1.msra.mxu0 %v730
    %732 = vmatprep.subr.mxu0 0.0
    %v733 = vand.u32 %v69, 4294901760
    %734 = vmatpush1.msra.mxu0 %v733
    %735 = vmatprep.subr.mxu0 0.0
    %v736 = vand.u32 %v70, 4294901760
    %737 = vmatpush1.msra.mxu0 %v736
    %738 = vmatprep.subr.mxu0 0.0
    %v739 = vand.u32 %v71, 4294901760
    %740 = vmatpush1.msra.mxu0 %v739
    %741 = vmatprep.subr.mxu0 0.0
    %v742 = vand.u32 %v72, 4294901760
    %743 = vmatpush1.msra.mxu0 %v742
    %744 = vmatprep.subr.mxu0 0.0
    %v745 = vand.u32 %v73, 4294901760
    %746 = vmatpush1.msra.mxu0 %v745
    %747 = vmatprep.subr.mxu0 0.0
    %v748 = vand.u32 %v74, 4294901760
    %749 = vmatpush1.msra.mxu0 %v748
    %750 = vmatprep.subr.mxu0 0.0
    %v751 = vand.u32 %v75, 4294901760
    %752 = vmatpush1.msra.mxu0 %v751
    %753 = vmatprep.subr.mxu0 0.0
    %v754 = vand.u32 %v76, 4294901760
    %755 = vmatpush1.msra.mxu0 %v754
    %756 = vmatprep.subr.mxu0 0.0
    %v757 = vand.u32 %v77, 4294901760
    %758 = vmatpush1.msra.mxu0 %v757
    %759 = vmatprep.subr.mxu0 0.0
    %v760 = vand.u32 %v78, 4294901760
    %761 = vmatpush1.msra.mxu0 %v760
    %762 = vmatprep.subr.mxu0 0.0
    %v763 = vand.u32 %v79, 4294901760
    %764 = vmatpush1.msra.mxu0 %v763
    %765 = vmatprep.subr.mxu0 0.0
    %v766 = vand.u32 %v80, 4294901760
    %767 = vmatpush1.msra.mxu0 %v766
    %768 = vmatprep.subr.mxu0 0.0
    %v769 = vand.u32 %v81, 4294901760
    %770 = vmatpush1.msra.mxu0 %v769
    %771 = vmatprep.subr.mxu0 0.0
    %772 = vmatpush1.msra.mxu0 0.0
    %773 = vmatprep.subr.mxu0 0.0
    %774 = vmatpush1.msra.mxu0 0.0
    %775 = vmatprep.subr.mxu0 0.0
    %776 = vmatpush1.msra.mxu0 0.0
    %777 = vmatprep.subr.mxu0 0.0
    %778 = vmatpush1.msra.mxu0 0.0
    %779 = vmatprep.subr.mxu0 0.0
    %780 = vmatpush1.msra.mxu0 0.0
    %781 = vmatprep.subr.mxu0 0.0
    %782 = vmatpush1.msra.mxu0 0.0
    %783 = vmatprep.subr.mxu0 0.0
    %784 = vmatpush1.msra.mxu0 0.0
    %785 = vmatprep.subr.mxu0 0.0
    %786 = vmatpush1.msra.mxu0 0.0
    %787 = vmatprep.subr.mxu0 0.0
    %788 = vmatpush1.msra.mxu0 0.0
    %789 = vmatprep.subr.mxu0 0.0
    %790 = vmatpush1.msra.mxu0 0.0
    %791 = vmatprep.subr.mxu0 0.0
    %792 = vmatpush1.msra.mxu0 0.0
    %793 = vmatprep.subr.mxu0 0.0
    %794 = vmatpush1.msra.mxu0 0.0
    %795 = vmatprep.subr.mxu0 0.0
    %796 = vmatpush1.msra.mxu0 0.0
    %797 = vmatprep.subr.mxu0 0.0
    %798 = vmatpush1.msra.mxu0 0.0
    %799 = vmatprep.subr.mxu0 0.0
    %800 = vmatpush1.msra.mxu0 0.0
    %801 = vmatprep.subr.mxu0 0.0
    %802 = vmatpush1.msra.mxu0 0.0
    %803 = vmatprep.mubr.f32.mxu0 0.0
    %v804 = vand.u32 %v49, 4294901760
    %v805 = vsub.f32 %v49, %v804
    %v806 = vand.u32 %v805, 4294901760
    %v807 = vsub.f32 %v805, %v806
    %v808 = vand.u32 %v807, 4294901760
    %809 = vmatmul.mubr.f32.gmra.mrb[0].mxu0 %v808
    %v810 = vpop.f32.mrb[0].mxu0
    %v811 = vadd.f32 0.0, %v810
    %v812 = vpop.f32.mrb[0].mxu0
    %813 = vdwg.mxu0
    %814 = vmatprep.subr.mxu0 0.0
    %v815 = vand.u32 %v66, 4294901760
    %v816 = vsub.f32 %v66, %v815
    %v817 = vand.u32 %v816, 4294901760
    %v818 = vsub.f32 %v816, %v817
    %v819 = vand.u32 %v818, 4294901760
    %820 = vmatpush1.msra.mxu0 %v819
    %821 = vmatprep.subr.mxu0 0.0
    %v822 = vand.u32 %v67, 4294901760
    %v823 = vsub.f32 %v67, %v822
    %v824 = vand.u32 %v823, 4294901760
    %v825 = vsub.f32 %v823, %v824
    %v826 = vand.u32 %v825, 4294901760
    %827 = vmatpush1.msra.mxu0 %v826
    %828 = vmatprep.subr.mxu0 0.0
    %v829 = vand.u32 %v68, 4294901760
    %v830 = vsub.f32 %v68, %v829
    %v831 = vand.u32 %v830, 4294901760
    %v832 = vsub.f32 %v830, %v831
    %v833 = vand.u32 %v832, 4294901760
    %834 = vmatpush1.msra.mxu0 %v833
    %835 = vmatprep.subr.mxu0 0.0
    %v836 = vand.u32 %v69, 4294901760
    %v837 = vsub.f32 %v69, %v836
    %v838 = vand.u32 %v837, 4294901760
    %v839 = vsub.f32 %v837, %v838
    %v840 = vand.u32 %v839, 4294901760
    %841 = vmatpush1.msra.mxu0 %v840
    %842 = vmatprep.subr.mxu0 0.0
    %v843 = vand.u32 %v70, 4294901760
    %v844 = vsub.f32 %v70, %v843
    %v845 = vand.u32 %v844, 4294901760
    %v846 = vsub.f32 %v844, %v845
    %v847 = vand.u32 %v846, 4294901760
    %848 = vmatpush1.msra.mxu0 %v847
    %849 = vmatprep.subr.mxu0 0.0
    %v850 = vand.u32 %v71, 4294901760
    %v851 = vsub.f32 %v71, %v850
    %v852 = vand.u32 %v851, 4294901760
    %v853 = vsub.f32 %v851, %v852
    %v854 = vand.u32 %v853, 4294901760
    %855 = vmatpush1.msra.mxu0 %v854
    %856 = vmatprep.subr.mxu0 0.0
    %v857 = vand.u32 %v72, 4294901760
    %v858 = vsub.f32 %v72, %v857
    %v859 = vand.u32 %v858, 4294901760
    %v860 = vsub.f32 %v858, %v859
    %v861 = vand.u32 %v860, 4294901760
    %862 = vmatpush1.msra.mxu0 %v861
    %863 = vmatprep.subr.mxu0 0.0
    %v864 = vand.u32 %v73, 4294901760
    %v865 = vsub.f32 %v73, %v864
    %v866 = vand.u32 %v865, 4294901760
    %v867 = vsub.f32 %v865, %v866
    %v868 = vand.u32 %v867, 4294901760
    %869 = vmatpush1.msra.mxu0 %v868
    %870 = vmatprep.subr.mxu0 0.0
    %v871 = vand.u32 %v74, 4294901760
    %v872 = vsub.f32 %v74, %v871
    %v873 = vand.u32 %v872, 4294901760
    %v874 = vsub.f32 %v872, %v873
    %v875 = vand.u32 %v874, 4294901760
    %876 = vmatpush1.msra.mxu0 %v875
    %877 = vmatprep.subr.mxu0 0.0
    %v878 = vand.u32 %v75, 4294901760
    %v879 = vsub.f32 %v75, %v878
    %v880 = vand.u32 %v879, 4294901760
    %v881 = vsub.f32 %v879, %v880
    %v882 = vand.u32 %v881, 4294901760
    %883 = vmatpush1.msra.mxu0 %v882
    %884 = vmatprep.subr.mxu0 0.0
    %v885 = vand.u32 %v76, 4294901760
    %v886 = vsub.f32 %v76, %v885
    %v887 = vand.u32 %v886, 4294901760
    %v888 = vsub.f32 %v886, %v887
    %v889 = vand.u32 %v888, 4294901760
    %890 = vmatpush1.msra.mxu0 %v889
    %891 = vmatprep.subr.mxu0 0.0
    %v892 = vand.u32 %v77, 4294901760
    %v893 = vsub.f32 %v77, %v892
    %v894 = vand.u32 %v893, 4294901760
    %v895 = vsub.f32 %v893, %v894
    %v896 = vand.u32 %v895, 4294901760
    %897 = vmatpush1.msra.mxu0 %v896
    %898 = vmatprep.subr.mxu0 0.0
    %v899 = vand.u32 %v78, 4294901760
    %v900 = vsub.f32 %v78, %v899
    %v901 = vand.u32 %v900, 4294901760
    %v902 = vsub.f32 %v900, %v901
    %v903 = vand.u32 %v902, 4294901760
    %904 = vmatpush1.msra.mxu0 %v903
    %905 = vmatprep.subr.mxu0 0.0
    %v906 = vand.u32 %v79, 4294901760
    %v907 = vsub.f32 %v79, %v906
    %v908 = vand.u32 %v907, 4294901760
    %v909 = vsub.f32 %v907, %v908
    %v910 = vand.u32 %v909, 4294901760
    %911 = vmatpush1.msra.mxu0 %v910
    %912 = vmatprep.subr.mxu0 0.0
    %v913 = vand.u32 %v80, 4294901760
    %v914 = vsub.f32 %v80, %v913
    %v915 = vand.u32 %v914, 4294901760
    %v916 = vsub.f32 %v914, %v915
    %v917 = vand.u32 %v916, 4294901760
    %918 = vmatpush1.msra.mxu0 %v917
    %919 = vmatprep.subr.mxu0 0.0
    %v920 = vand.u32 %v81, 4294901760
    %v921 = vsub.f32 %v81, %v920
    %v922 = vand.u32 %v921, 4294901760
    %v923 = vsub.f32 %v921, %v922
    %v924 = vand.u32 %v923, 4294901760
    %925 = vmatpush1.msra.mxu0 %v924
    %926 = vmatprep.subr.mxu0 0.0
    %927 = vmatpush1.msra.mxu0 0.0
    %928 = vmatprep.subr.mxu0 0.0
    %929 = vmatpush1.msra.mxu0 0.0
    %930 = vmatprep.subr.mxu0 0.0
    %931 = vmatpush1.msra.mxu0 0.0
    %932 = vmatprep.subr.mxu0 0.0
    %933 = vmatpush1.msra.mxu0 0.0
    %934 = vmatprep.subr.mxu0 0.0
    %935 = vmatpush1.msra.mxu0 0.0
    %936 = vmatprep.subr.mxu0 0.0
    %937 = vmatpush1.msra.mxu0 0.0
    %938 = vmatprep.subr.mxu0 0.0
    %939 = vmatpush1.msra.mxu0 0.0
    %940 = vmatprep.subr.mxu0 0.0
    %941 = vmatpush1.msra.mxu0 0.0
    %942 = vmatprep.subr.mxu0 0.0
    %943 = vmatpush1.msra.mxu0 0.0
    %944 = vmatprep.subr.mxu0 0.0
    %945 = vmatpush1.msra.mxu0 0.0
    %946 = vmatprep.subr.mxu0 0.0
    %947 = vmatpush1.msra.mxu0 0.0
    %948 = vmatprep.subr.mxu0 0.0
    %949 = vmatpush1.msra.mxu0 0.0
    %950 = vmatprep.subr.mxu0 0.0
    %951 = vmatpush1.msra.mxu0 0.0
    %952 = vmatprep.subr.mxu0 0.0
    %953 = vmatpush1.msra.mxu0 0.0
    %954 = vmatprep.subr.mxu0 0.0
    %955 = vmatpush1.msra.mxu0 0.0
    %956 = vmatprep.subr.mxu0 0.0
    %957 = vmatpush1.msra.mxu0 0.0
    %958 = vmatprep.mubr.f32.mxu0 0.0
    %v959 = vand.u32 %v49, 4294901760
    %960 = vmatmul.mubr.f32.gmra.mrb[0].mxu0 %v959
    %v961 = vpop.f32.mrb[0].mxu0
    %v962 = vadd.f32 %v811, %v961
    %v963 = vpop.f32.mrb[0].mxu0
    %964 = vdwg.mxu0
    %965 = vmatprep.subr.mxu0 0.0
    %v966 = vand.u32 %v66, 4294901760
    %v967 = vsub.f32 %v66, %v966
    %968 = vmatpush1.msra.mxu0 %v967
    %969 = vmatprep.subr.mxu0 0.0
    %v970 = vand.u32 %v67, 4294901760
    %v971 = vsub.f32 %v67, %v970
    %972 = vmatpush1.msra.mxu0 %v971
    %973 = vmatprep.subr.mxu0 0.0
    %v974 = vand.u32 %v68, 4294901760
    %v975 = vsub.f32 %v68, %v974
    %976 = vmatpush1.msra.mxu0 %v975
    %977 = vmatprep.subr.mxu0 0.0
    %v978 = vand.u32 %v69, 4294901760
    %v979 = vsub.f32 %v69, %v978
    %980 = vmatpush1.msra.mxu0 %v979
    %981 = vmatprep.subr.mxu0 0.0
    %v982 = vand.u32 %v70, 4294901760
    %v983 = vsub.f32 %v70, %v982
    %984 = vmatpush1.msra.mxu0 %v983
    %985 = vmatprep.subr.mxu0 0.0
    %v986 = vand.u32 %v71, 4294901760
    %v987 = vsub.f32 %v71, %v986
    %988 = vmatpush1.msra.mxu0 %v987
    %989 = vmatprep.subr.mxu0 0.0
    %v990 = vand.u32 %v72, 4294901760
    %v991 = vsub.f32 %v72, %v990
    %992 = vmatpush1.msra.mxu0 %v991
    %993 = vmatprep.subr.mxu0 0.0
    %v994 = vand.u32 %v73, 4294901760
    %v995 = vsub.f32 %v73, %v994
    %996 = vmatpush1.msra.mxu0 %v995
    %997 = vmatprep.subr.mxu0 0.0
    %v998 = vand.u32 %v74, 4294901760
    %v999 = vsub.f32 %v74, %v998
    %1000 = vmatpush1.msra.mxu0 %v999
    %1001 = vmatprep.subr.mxu0 0.0
    %v1002 = vand.u32 %v75, 4294901760
    %v1003 = vsub.f32 %v75, %v1002
    %1004 = vmatpush1.msra.mxu0 %v1003
    %1005 = vmatprep.subr.mxu0 0.0
    %v1006 = vand.u32 %v76, 4294901760
    %v1007 = vsub.f32 %v76, %v1006
    %1008 = vmatpush1.msra.mxu0 %v1007
    %1009 = vmatprep.subr.mxu0 0.0
    %v1010 = vand.u32 %v77, 4294901760
    %v1011 = vsub.f32 %v77, %v1010
    %1012 = vmatpush1.msra.mxu0 %v1011
    %1013 = vmatprep.subr.mxu0 0.0
    %v1014 = vand.u32 %v78, 4294901760
    %v1015 = vsub.f32 %v78, %v1014
    %1016 = vmatpush1.msra.mxu0 %v1015
    %1017 = vmatprep.subr.mxu0 0.0
    %v1018 = vand.u32 %v79, 4294901760
    %v1019 = vsub.f32 %v79, %v1018
    %1020 = vmatpush1.msra.mxu0 %v1019
    %1021 = vmatprep.subr.mxu0 0.0
    %v1022 = vand.u32 %v80, 4294901760
    %v1023 = vsub.f32 %v80, %v1022
    %1024 = vmatpush1.msra.mxu0 %v1023
    %1025 = vmatprep.subr.mxu0 0.0
    %v1026 = vand.u32 %v81, 4294901760
    %v1027 = vsub.f32 %v81, %v1026
    %1028 = vmatpush1.msra.mxu0 %v1027
    %1029 = vmatprep.subr.mxu0 0.0
    %1030 = vmatpush1.msra.mxu0 0.0
    %1031 = vmatprep.subr.mxu0 0.0
    %1032 = vmatpush1.msra.mxu0 0.0
    %1033 = vmatprep.subr.mxu0 0.0
    %1034 = vmatpush1.msra.mxu0 0.0
    %1035 = vmatprep.subr.mxu0 0.0
    %1036 = vmatpush1.msra.mxu0 0.0
    %1037 = vmatprep.subr.mxu0 0.0
    %1038 = vmatpush1.msra.mxu0 0.0
    %1039 = vmatprep.subr.mxu0 0.0
    %1040 = vmatpush1.msra.mxu0 0.0
    %1041 = vmatprep.subr.mxu0 0.0
    %1042 = vmatpush1.msra.mxu0 0.0
    %1043 = vmatprep.subr.mxu0 0.0
    %1044 = vmatpush1.msra.mxu0 0.0
    %1045 = vmatprep.subr.mxu0 0.0
    %1046 = vmatpush1.msra.mxu0 0.0
    %1047 = vmatprep.subr.mxu0 0.0
    %1048 = vmatpush1.msra.mxu0 0.0
    %1049 = vmatprep.subr.mxu0 0.0
    %1050 = vmatpush1.msra.mxu0 0.0
    %1051 = vmatprep.subr.mxu0 0.0
    %1052 = vmatpush1.msra.mxu0 0.0
    %1053 = vmatprep.subr.mxu0 0.0
    %1054 = vmatpush1.msra.mxu0 0.0
    %1055 = vmatprep.subr.mxu0 0.0
    %1056 = vmatpush1.msra.mxu0 0.0
    %1057 = vmatprep.subr.mxu0 0.0
    %1058 = vmatpush1.msra.mxu0 0.0
    %1059 = vmatprep.subr.mxu0 0.0
    %1060 = vmatpush1.msra.mxu0 0.0
    %1061 = vmatprep.mubr.f32.mxu0 0.0
    %v1062 = vand.u32 %v49, 4294901760
    %v1063 = vsub.f32 %v49, %v1062
    %1064 = vmatmul.mubr.f32.gmra.mrb[0].mxu0 %v1063
    %v1065 = vpop.f32.mrb[0].mxu0
    %v1066 = vadd.f32 %v962, %v1065
    %v1067 = vpop.f32.mrb[0].mxu0
    %1068 = vdwg.mxu0
    %1069 = vmatprep.subr.mxu0 0.0
    %v1070 = vand.u32 %v66, 4294901760
    %1071 = vmatpush1.msra.mxu0 %v1070
    %1072 = vmatprep.subr.mxu0 0.0
    %v1073 = vand.u32 %v67, 4294901760
    %1074 = vmatpush1.msra.mxu0 %v1073
    %1075 = vmatprep.subr.mxu0 0.0
    %v1076 = vand.u32 %v68, 4294901760
    %1077 = vmatpush1.msra.mxu0 %v1076
    %1078 = vmatprep.subr.mxu0 0.0
    %v1079 = vand.u32 %v69, 4294901760
    %1080 = vmatpush1.msra.mxu0 %v1079
    %1081 = vmatprep.subr.mxu0 0.0
    %v1082 = vand.u32 %v70, 4294901760
    %1083 = vmatpush1.msra.mxu0 %v1082
    %1084 = vmatprep.subr.mxu0 0.0
    %v1085 = vand.u32 %v71, 4294901760
    %1086 = vmatpush1.msra.mxu0 %v1085
    %1087 = vmatprep.subr.mxu0 0.0
    %v1088 = vand.u32 %v72, 4294901760
    %1089 = vmatpush1.msra.mxu0 %v1088
    %1090 = vmatprep.subr.mxu0 0.0
    %v1091 = vand.u32 %v73, 4294901760
    %1092 = vmatpush1.msra.mxu0 %v1091
    %1093 = vmatprep.subr.mxu0 0.0
    %v1094 = vand.u32 %v74, 4294901760
    %1095 = vmatpush1.msra.mxu0 %v1094
    %1096 = vmatprep.subr.mxu0 0.0
    %v1097 = vand.u32 %v75, 4294901760
    %1098 = vmatpush1.msra.mxu0 %v1097
    %1099 = vmatprep.subr.mxu0 0.0
    %v1100 = vand.u32 %v76, 4294901760
    %1101 = vmatpush1.msra.mxu0 %v1100
    %1102 = vmatprep.subr.mxu0 0.0
    %v1103 = vand.u32 %v77, 4294901760
    %1104 = vmatpush1.msra.mxu0 %v1103
    %1105 = vmatprep.subr.mxu0 0.0
    %v1106 = vand.u32 %v78, 4294901760
    %1107 = vmatpush1.msra.mxu0 %v1106
    %1108 = vmatprep.subr.mxu0 0.0
    %v1109 = vand.u32 %v79, 4294901760
    %1110 = vmatpush1.msra.mxu0 %v1109
    %1111 = vmatprep.subr.mxu0 0.0
    %v1112 = vand.u32 %v80, 4294901760
    %1113 = vmatpush1.msra.mxu0 %v1112
    %1114 = vmatprep.subr.mxu0 0.0
    %v1115 = vand.u32 %v81, 4294901760
    %1116 = vmatpush1.msra.mxu0 %v1115
    %1117 = vmatprep.subr.mxu0 0.0
    %1118 = vmatpush1.msra.mxu0 0.0
    %1119 = vmatprep.subr.mxu0 0.0
    %1120 = vmatpush1.msra.mxu0 0.0
    %1121 = vmatprep.subr.mxu0 0.0
    %1122 = vmatpush1.msra.mxu0 0.0
    %1123 = vmatprep.subr.mxu0 0.0
    %1124 = vmatpush1.msra.mxu0 0.0
    %1125 = vmatprep.subr.mxu0 0.0
    %1126 = vmatpush1.msra.mxu0 0.0
    %1127 = vmatprep.subr.mxu0 0.0
    %1128 = vmatpush1.msra.mxu0 0.0
    %1129 = vmatprep.subr.mxu0 0.0
    %1130 = vmatpush1.msra.mxu0 0.0
    %1131 = vmatprep.subr.mxu0 0.0
    %1132 = vmatpush1.msra.mxu0 0.0
    %1133 = vmatprep.subr.mxu0 0.0
    %1134 = vmatpush1.msra.mxu0 0.0
    %1135 = vmatprep.subr.mxu0 0.0
    %1136 = vmatpush1.msra.mxu0 0.0
    %1137 = vmatprep.subr.mxu0 0.0
    %1138 = vmatpush1.msra.mxu0 0.0
    %1139 = vmatprep.subr.mxu0 0.0
    %1140 = vmatpush1.msra.mxu0 0.0
    %1141 = vmatprep.subr.mxu0 0.0
    %1142 = vmatpush1.msra.mxu0 0.0
    %1143 = vmatprep.subr.mxu0 0.0
    %1144 = vmatpush1.msra.mxu0 0.0
    %1145 = vmatprep.subr.mxu0 0.0
    %1146 = vmatpush1.msra.mxu0 0.0
    %1147 = vmatprep.subr.mxu0 0.0
    %1148 = vmatpush1.msra.mxu0 0.0
    %1149 = vmatprep.mubr.f32.mxu0 0.0
    %v1150 = vand.u32 %v49, 4294901760
    %v1151 = vsub.f32 %v49, %v1150
    %v1152 = vand.u32 %v1151, 4294901760
    %1153 = vmatmul.mubr.f32.gmra.mrb[0].mxu0 %v1152
    %v1154 = vpop.f32.mrb[0].mxu0
    %v1155 = vadd.f32 %v1066, %v1154
    %v1156 = vpop.f32.mrb[0].mxu0
    %1157 = vdwg.mxu0
    %1158 = vmatprep.subr.mxu0 0.0
    %v1159 = vand.u32 %v66, 4294901760
    %v1160 = vsub.f32 %v66, %v1159
    %v1161 = vand.u32 %v1160, 4294901760
    %1162 = vmatpush1.msra.mxu0 %v1161
    %1163 = vmatprep.subr.mxu0 0.0
    %v1164 = vand.u32 %v67, 4294901760
    %v1165 = vsub.f32 %v67, %v1164
    %v1166 = vand.u32 %v1165, 4294901760
    %1167 = vmatpush1.msra.mxu0 %v1166
    %1168 = vmatprep.subr.mxu0 0.0
    %v1169 = vand.u32 %v68, 4294901760
    %v1170 = vsub.f32 %v68, %v1169
    %v1171 = vand.u32 %v1170, 4294901760
    %1172 = vmatpush1.msra.mxu0 %v1171
    %1173 = vmatprep.subr.mxu0 0.0
    %v1174 = vand.u32 %v69, 4294901760
    %v1175 = vsub.f32 %v69, %v1174
    %v1176 = vand.u32 %v1175, 4294901760
    %1177 = vmatpush1.msra.mxu0 %v1176
    %1178 = vmatprep.subr.mxu0 0.0
    %v1179 = vand.u32 %v70, 4294901760
    %v1180 = vsub.f32 %v70, %v1179
    %v1181 = vand.u32 %v1180, 4294901760
    %1182 = vmatpush1.msra.mxu0 %v1181
    %1183 = vmatprep.subr.mxu0 0.0
    %v1184 = vand.u32 %v71, 4294901760
    %v1185 = vsub.f32 %v71, %v1184
    %v1186 = vand.u32 %v1185, 4294901760
    %1187 = vmatpush1.msra.mxu0 %v1186
    %1188 = vmatprep.subr.mxu0 0.0
    %v1189 = vand.u32 %v72, 4294901760
    %v1190 = vsub.f32 %v72, %v1189
    %v1191 = vand.u32 %v1190, 4294901760
    %1192 = vmatpush1.msra.mxu0 %v1191
    %1193 = vmatprep.subr.mxu0 0.0
    %v1194 = vand.u32 %v73, 4294901760
    %v1195 = vsub.f32 %v73, %v1194
    %v1196 = vand.u32 %v1195, 4294901760
    %1197 = vmatpush1.msra.mxu0 %v1196
    %1198 = vmatprep.subr.mxu0 0.0
    %v1199 = vand.u32 %v74, 4294901760
    %v1200 = vsub.f32 %v74, %v1199
    %v1201 = vand.u32 %v1200, 4294901760
    %1202 = vmatpush1.msra.mxu0 %v1201
    %1203 = vmatprep.subr.mxu0 0.0
    %v1204 = vand.u32 %v75, 4294901760
    %v1205 = vsub.f32 %v75, %v1204
    %v1206 = vand.u32 %v1205, 4294901760
    %1207 = vmatpush1.msra.mxu0 %v1206
    %1208 = vmatprep.subr.mxu0 0.0
    %v1209 = vand.u32 %v76, 4294901760
    %v1210 = vsub.f32 %v76, %v1209
    %v1211 = vand.u32 %v1210, 4294901760
    %1212 = vmatpush1.msra.mxu0 %v1211
    %1213 = vmatprep.subr.mxu0 0.0
    %v1214 = vand.u32 %v77, 4294901760
    %v1215 = vsub.f32 %v77, %v1214
    %v1216 = vand.u32 %v1215, 4294901760
    %1217 = vmatpush1.msra.mxu0 %v1216
    %1218 = vmatprep.subr.mxu0 0.0
    %v1219 = vand.u32 %v78, 4294901760
    %v1220 = vsub.f32 %v78, %v1219
    %v1221 = vand.u32 %v1220, 4294901760
    %1222 = vmatpush1.msra.mxu0 %v1221
    %1223 = vmatprep.subr.mxu0 0.0
    %v1224 = vand.u32 %v79, 4294901760
    %v1225 = vsub.f32 %v79, %v1224
    %v1226 = vand.u32 %v1225, 4294901760
    %1227 = vmatpush1.msra.mxu0 %v1226
    %1228 = vmatprep.subr.mxu0 0.0
    %v1229 = vand.u32 %v80, 4294901760
    %v1230 = vsub.f32 %v80, %v1229
    %v1231 = vand.u32 %v1230, 4294901760
    %1232 = vmatpush1.msra.mxu0 %v1231
    %1233 = vmatprep.subr.mxu0 0.0
    %v1234 = vand.u32 %v81, 4294901760
    %v1235 = vsub.f32 %v81, %v1234
    %v1236 = vand.u32 %v1235, 4294901760
    %1237 = vmatpush1.msra.mxu0 %v1236
    %1238 = vmatprep.subr.mxu0 0.0
    %1239 = vmatpush1.msra.mxu0 0.0
    %1240 = vmatprep.subr.mxu0 0.0
    %1241 = vmatpush1.msra.mxu0 0.0
    %1242 = vmatprep.subr.mxu0 0.0
    %1243 = vmatpush1.msra.mxu0 0.0
    %1244 = vmatprep.subr.mxu0 0.0
    %1245 = vmatpush1.msra.mxu0 0.0
    %1246 = vmatprep.subr.mxu0 0.0
    %1247 = vmatpush1.msra.mxu0 0.0
    %1248 = vmatprep.subr.mxu0 0.0
    %1249 = vmatpush1.msra.mxu0 0.0
    %1250 = vmatprep.subr.mxu0 0.0
    %1251 = vmatpush1.msra.mxu0 0.0
    %1252 = vmatprep.subr.mxu0 0.0
    %1253 = vmatpush1.msra.mxu0 0.0
    %1254 = vmatprep.subr.mxu0 0.0
    %1255 = vmatpush1.msra.mxu0 0.0
    %1256 = vmatprep.subr.mxu0 0.0
    %1257 = vmatpush1.msra.mxu0 0.0
    %1258 = vmatprep.subr.mxu0 0.0
    %1259 = vmatpush1.msra.mxu0 0.0
    %1260 = vmatprep.subr.mxu0 0.0
    %1261 = vmatpush1.msra.mxu0 0.0
    %1262 = vmatprep.subr.mxu0 0.0
    %1263 = vmatpush1.msra.mxu0 0.0
    %1264 = vmatprep.subr.mxu0 0.0
    %1265 = vmatpush1.msra.mxu0 0.0
    %1266 = vmatprep.subr.mxu0 0.0
    %1267 = vmatpush1.msra.mxu0 0.0
    %1268 = vmatprep.subr.mxu0 0.0
    %1269 = vmatpush1.msra.mxu0 0.0
    %1270 = vmatprep.mubr.f32.mxu0 0.0
    %v1271 = vand.u32 %v49, 4294901760
    %1272 = vmatmul.mubr.f32.gmra.mrb[0].mxu0 %v1271
    %v1273 = vpop.f32.mrb[0].mxu0
    %v1274 = vadd.f32 %v1155, %v1273
    %v1275 = vpop.f32.mrb[0].mxu0
    %1276 = vdwg.mxu0
    %1277 = vmatprep.subr.mxu0 0.0
    %v1278 = vand.u32 %v66, 4294901760
    %1279 = vmatpush1.msra.mxu0 %v1278
    %1280 = vmatprep.subr.mxu0 0.0
    %v1281 = vand.u32 %v67, 4294901760
    %1282 = vmatpush1.msra.mxu0 %v1281
    %1283 = vmatprep.subr.mxu0 0.0
    %v1284 = vand.u32 %v68, 4294901760
    %1285 = vmatpush1.msra.mxu0 %v1284
    %1286 = vmatprep.subr.mxu0 0.0
    %v1287 = vand.u32 %v69, 4294901760
    %1288 = vmatpush1.msra.mxu0 %v1287
    %1289 = vmatprep.subr.mxu0 0.0
    %v1290 = vand.u32 %v70, 4294901760
    %1291 = vmatpush1.msra.mxu0 %v1290
    %1292 = vmatprep.subr.mxu0 0.0
    %v1293 = vand.u32 %v71, 4294901760
    %1294 = vmatpush1.msra.mxu0 %v1293
    %1295 = vmatprep.subr.mxu0 0.0
    %v1296 = vand.u32 %v72, 4294901760
    %1297 = vmatpush1.msra.mxu0 %v1296
    %1298 = vmatprep.subr.mxu0 0.0
    %v1299 = vand.u32 %v73, 4294901760
    %1300 = vmatpush1.msra.mxu0 %v1299
    %1301 = vmatprep.subr.mxu0 0.0
    %v1302 = vand.u32 %v74, 4294901760
    %1303 = vmatpush1.msra.mxu0 %v1302
    %1304 = vmatprep.subr.mxu0 0.0
    %v1305 = vand.u32 %v75, 4294901760
    %1306 = vmatpush1.msra.mxu0 %v1305
    %1307 = vmatprep.subr.mxu0 0.0
    %v1308 = vand.u32 %v76, 4294901760
    %1309 = vmatpush1.msra.mxu0 %v1308
    %1310 = vmatprep.subr.mxu0 0.0
    %v1311 = vand.u32 %v77, 4294901760
    %1312 = vmatpush1.msra.mxu0 %v1311
    %1313 = vmatprep.subr.mxu0 0.0
    %v1314 = vand.u32 %v78, 4294901760
    %1315 = vmatpush1.msra.mxu0 %v1314
    %1316 = vmatprep.subr.mxu0 0.0
    %v1317 = vand.u32 %v79, 4294901760
    %1318 = vmatpush1.msra.mxu0 %v1317
    %1319 = vmatprep.subr.mxu0 0.0
    %v1320 = vand.u32 %v80, 4294901760
    %1321 = vmatpush1.msra.mxu0 %v1320
    %1322 = vmatprep.subr.mxu0 0.0
    %v1323 = vand.u32 %v81, 4294901760
    %1324 = vmatpush1.msra.mxu0 %v1323
    %1325 = vmatprep.subr.mxu0 0.0
    %1326 = vmatpush1.msra.mxu0 0.0
    %1327 = vmatprep.subr.mxu0 0.0
    %1328 = vmatpush1.msra.mxu0 0.0
    %1329 = vmatprep.subr.mxu0 0.0
    %1330 = vmatpush1.msra.mxu0 0.0
    %1331 = vmatprep.subr.mxu0 0.0
    %1332 = vmatpush1.msra.mxu0 0.0
    %1333 = vmatprep.subr.mxu0 0.0
    %1334 = vmatpush1.msra.mxu0 0.0
    %1335 = vmatprep.subr.mxu0 0.0
    %1336 = vmatpush1.msra.mxu0 0.0
    %1337 = vmatprep.subr.mxu0 0.0
    %1338 = vmatpush1.msra.mxu0 0.0
    %1339 = vmatprep.subr.mxu0 0.0
    %1340 = vmatpush1.msra.mxu0 0.0
    %1341 = vmatprep.subr.mxu0 0.0
    %1342 = vmatpush1.msra.mxu0 0.0
    %1343 = vmatprep.subr.mxu0 0.0
    %1344 = vmatpush1.msra.mxu0 0.0
    %1345 = vmatprep.subr.mxu0 0.0
    %1346 = vmatpush1.msra.mxu0 0.0
    %1347 = vmatprep.subr.mxu0 0.0
    %1348 = vmatpush1.msra.mxu0 0.0
    %1349 = vmatprep.subr.mxu0 0.0
    %1350 = vmatpush1.msra.mxu0 0.0
    %1351 = vmatprep.subr.mxu0 0.0
    %1352 = vmatpush1.msra.mxu0 0.0
    %1353 = vmatprep.subr.mxu0 0.0
    %1354 = vmatpush1.msra.mxu0 0.0
    %1355 = vmatprep.subr.mxu0 0.0
    %1356 = vmatpush1.msra.mxu0 0.0
    %1357 = vmatprep.mubr.f32.mxu0 0.0
    %v1358 = vand.u32 %v49, 4294901760
    %1359 = vmatmul.mubr.f32.gmra.mrb[0].mxu0 %v1358
    %v1360 = vpop.f32.mrb[0].mxu0
    %v1361 = vadd.f32 %v1274, %v1360
    %v1362 = vpop.f32.mrb[0].mxu0
    %1363 = vdwg.mxu0
    %v1364 = vadd.f32 %v46, %v720
    %v1365 = vadd.f32 %v47, %v1361
    %1366 = vst [vmem:[#allocation2] sm:$0xff] %v1364
    %1367 = vst [vmem:[#allocation2 + $0x8] sm:$0xff] %v1365
    // Predicated region
    $region22: #{tpu_custom_call.1} parent=1 // pred_check
      %p1368 = pneg %p40
    $region23: #{tpu_custom_call.1} parent=1 // pred_check_branch
      %1370 = sbr.rel (%p1368) target = $region25
    $region24: #{tpu_custom_call.1} parent=1 // pred_region
      %v1371 = vld [vmem:[#allocation2] sm:$0xff]
      %v1372 = vld [vmem:[#allocation2 + $0x8] sm:$0xff]
      %1373 = vst [vmem:[#allocation8] sm:$0xff] %v1371
      %1374 = vst [vmem:[#allocation8 + $0x8] sm:$0xff] %v1372
    $region25: #{tpu_custom_call.1} parent=1 // pred_fallthru
      _
    // Predicated region
    $region26: #{tpu_custom_call.1} parent=1 // pred_check
      _
    $region27: #{tpu_custom_call.1} parent=1 // pred_check_branch
      %1376 = sbr.rel (0) target = $region29
    $region28: #{tpu_custom_call.1} parent=1 // pred_region
      %s1378 = ssub.s32 256, 256
      %1379 = vsyncadd [#allocation5], %s1378
      %s1380 = sshll.u32 [#allocation8], 4
      %s1381 = int_to_ptr.vmem [resolvable:$true] %s1380
      %1386 = dma.vmem_to_hbm [thread:$0]  %s1381, 256, %s2, [#allocation5], 128, 128, 8
    $region29: #{tpu_custom_call.1} parent=1 // pred_fallthru
      _
    // Predicated region
    $region30: #{tpu_custom_call.1} parent=1 // pred_check
      _
    $region31: #{tpu_custom_call.1} parent=1 // pred_check_branch
      %1388 = sbr.rel (0) target = $region33
    $region32: #{tpu_custom_call.1} parent=1 // pred_region
      %1389 = dma.done [#allocation5], 256
    $region33: #{tpu_custom_call.1} parent=1 // pred_fallthru
      _
    %1390 = vsyncpa [#allocation4], 1
    %1391 = vsyncpa [#allocation7], 1
    %1392 = vsyncpa [#allocation5], 1

</llo_original>
